<compile_context>
chip_gen: v6e
topology: v6e:2x2x1
jax: 0.10.0
libtpu: 0.0.40
codegen_flags: <defaults>
</compile_context>

<pallas_src>
import jax
import jax.numpy as jnp
from jax.experimental import pallas as pl
from jax.experimental.pallas import tpu as pltpu

_LANE = 128
_TAP_OFFSETS = tuple((ddh, ddw) for ddh in (-1, 0, 1) for ddw in (-1, 0, 1))
_CENTER_TAP = 4


# ----------------------------- capability probes ------------------------------

_ROLL_PROBE = None          # (numpy_convention: bool, bf16_roll_ok: bool)
_BUFFERED_ONE = None        # bool


def _probe_roll():
    """Probe pltpu.roll's rotation direction and packed-bf16 support once.

    np.roll convention: result[i] = x[(i - shift) % N].  The conv tap shifts below are
    computed for whichever convention the installed lowering uses.
    """
    global _ROLL_PROBE
    if _ROLL_PROBE is not None:
        return _ROLL_PROBE

    def probe(x_ref, o_ref):
        o_ref[...] = pltpu.roll(x_ref[...], 1, axis=0)

    xf = jnp.tile(jnp.arange(8, dtype=jnp.float32)[:, None], (1, _LANE))
    of = pl.pallas_call(probe, out_shape=jax.ShapeDtypeStruct((8, _LANE), jnp.float32))(xf)
    numpy_conv = bool(of[0, 0] == 7.0)

    bf16_ok = False
    try:
        xb = jnp.tile(jnp.arange(16, dtype=jnp.bfloat16)[:, None], (1, _LANE))
        ob = pl.pallas_call(probe, out_shape=jax.ShapeDtypeStruct((16, _LANE), jnp.bfloat16))(xb)
        jax.block_until_ready(ob)
        expect = 15.0 if numpy_conv else 1.0
        bf16_ok = bool(ob[0, 0] == expect)
    except Exception:
        bf16_ok = False

    _ROLL_PROBE = (numpy_conv, bf16_ok)
    return _ROLL_PROBE


def _buffered_one_supported():
    """Probe pipeline_mode=pl.Buffered(1) (single-buffered constant operands)."""
    global _BUFFERED_ONE
    if _BUFFERED_ONE is not None:
        return _BUFFERED_ONE
    if not hasattr(pl, "Buffered"):
        _BUFFERED_ONE = False
        return False
    try:
        def probe(x_ref, o_ref):
            o_ref[...] = x_ref[...] + 1.0

        x = jnp.zeros((8, _LANE), jnp.float32)
        out = pl.pallas_call(
            probe,
            out_shape=jax.ShapeDtypeStruct((8, _LANE), jnp.float32),
            grid=(2,),
            in_specs=[pl.BlockSpec((8, _LANE), lambda i: (0, 0),
                                   pipeline_mode=pl.Buffered(1))],
            out_specs=pl.BlockSpec((8, _LANE), lambda i: (0, 0)),
        )(x)
        jax.block_until_ready(out)
        _BUFFERED_ONE = bool(jnp.all(out == 1.0))
    except Exception:
        _BUFFERED_ONE = False
    return _BUFFERED_ONE


# ----------------------------- in-kernel helpers -------------------------------

def _gn_silu(x3, gamma, beta, avg_mat, eps):
    """Per-sample GroupNorm (two-pass variance) + SiLU.

    x3: (Bt, HW, C) f32; gamma/beta: (1, C) f32; avg_mat: (C, C) f32 group-average matrix
    with 1/(HW * C_real/G) folded in (zero rows/cols for padded channels).
    """
    s = jnp.sum(x3, axis=1)                                                   # (Bt, C)
    mean_c = jnp.dot(s, avg_mat, preferred_element_type=jnp.float32)          # (Bt, C)
    xc = x3 - mean_c[:, None, :]
    ss = jnp.sum(xc * xc, axis=1)                                             # (Bt, C)
    var_c = jnp.dot(ss, avg_mat, preferred_element_type=jnp.float32)          # (Bt, C)
    inv_c = jax.lax.rsqrt(var_c + eps)
    y = xc * (inv_c * gamma)[:, None, :] + beta
    # SiLU: exp and approx-reciprocal both ride the EUP slot.  Keep this op order:
    # exp(-y)=inf for very negative y -> reciprocal(inf)=0 -> y*0=0 (no NaNs).
    return y * pl.reciprocal(1.0 + jnp.exp(-y), approx=True)


def _conv3x3(h2d, w_ref, bias, masks, W, numpy_roll, roll_bf16):
    """3x3 'same' conv as 9 accumulated (N,C)x(C,Cout) matmuls, one rolled+masked tap live
    at a time.

    h2d: (N, C) f32 flattened over (Bt, H, W); w_ref: (9*C, Cout) bf16 Ref with tap-major
    rows (tap = kh*3 + kw); bias: (1, Cout) f32; masks: (N, 9) bf16 boundary masks.
    """
    N, C = h2d.shape
    hb = h2d.astype(jnp.bfloat16)
    hsrc = hb if roll_bf16 else h2d        # bf16 rolls halve XLU traffic (probed support)
    # Center tap (no roll, no mask) initializes the accumulator (no zeros+add pass).
    acc = jnp.dot(hb, w_ref[_CENTER_TAP * C:(_CENTER_TAP + 1) * C, :],
                  preferred_element_type=jnp.float32)
    for t, (ddh, ddw) in enumerate(_TAP_OFFSETS):
        if t == _CENTER_TAP:
            continue
        k = ddh * W + ddw                  # want patch[i] = h[(i + k) % N], then mask
        shift = ((-k) if numpy_roll else k) % N
        p = pltpu.roll(hsrc, shift, axis=0) * masks[:, t:t + 1]
        acc = acc + jnp.dot(p.astype(jnp.bfloat16), w_ref[t * C:(t + 1) * C, :],
                            preferred_element_type=jnp.float32)
    return acc + bias


def _make_kernel(Bt, H, W, Cinp, Coutp, eps, use_res_conv, numpy_roll, roll_bf16):
    HW = H * W
    N = Bt * HW

    def kernel(x_ref, masks_ref, a1_ref, a2_ref,
               g1_ref, bt1_ref, w1_ref, cb1_ref,
               g2_ref, bt2_ref, w2_ref, cb2_ref, *rest):
        if use_res_conv:
            wres_ref, bres_ref, o_ref = rest
        else:
            (o_ref,) = rest

        masks = masks_ref[...]                                # (N, 9) bf16, reused by both convs
        x3 = x_ref[...].reshape(Bt, HW, Cinp)                 # f32

        h = _gn_silu(x3, g1_ref[...], bt1_ref[...], a1_ref[...], eps)
        h = _conv3x3(h.reshape(N, Cinp), w1_ref, cb1_ref[...], masks, W, numpy_roll, roll_bf16)
        h = _gn_silu(h.reshape(Bt, HW, Coutp), g2_ref[...], bt2_ref[...], a2_ref[...], eps)
        h = _conv3x3(h.reshape(N, Coutp), w2_ref, cb2_ref[...], masks, W, numpy_roll, roll_bf16)

        if use_res_conv:
            res = jnp.dot(x3.reshape(N, Cinp).astype(jnp.bfloat16), wres_ref[...],
                          preferred_element_type=jnp.float32) + bres_ref[...]
        else:
            res = x3.reshape(N, Cinp)

        o_ref[...] = (h + res).reshape(Bt, H, W, Coutp)

    return kernel


# ----------------------------- host-side helpers -------------------------------

def _round_up(x, m):
    return (x + m - 1) // m * m


def _tap_masks_host(Bt, H, W):
    """(Bt*H*W, 9) bf16 validity masks for the 9 rolled taps (col 4 = center, all ones).
    The masks also prevent cross-sample bleed when Bt samples are packed per grid step."""
    hw = H * W
    pix = jnp.arange(Bt * hw) % hw
    hh = pix // W
    ww = pix % W
    cols = []
    for ddh, ddw in _TAP_OFFSETS:
        hv = (hh + ddh >= 0) & (hh + ddh < H)
        wv = (ww + ddw >= 0) & (ww + ddw < W)
        cols.append(hv & wv)
    return jnp.stack(cols, axis=1).astype(jnp.bfloat16)


def _avg_matrix_host(c_real, c_pad, groups, hw):
    """(C_pad, C_pad) f32 group-average matrix: 1/(HW * C_real/G) on same-(real)-group
    entries, zero elsewhere (padded channels map to no group)."""
    cg = c_real // groups
    idx = jnp.arange(c_pad)
    grp = jnp.where(idx < c_real, idx // cg, -1)
    same = (grp[:, None] == grp[None, :]) & (grp[:, None] >= 0)
    return same.astype(jnp.float32) / float(hw * cg)


def _pad_vec(v, c_pad):
    return jnp.pad(v.astype(jnp.float32), (0, c_pad - v.shape[0])).reshape(1, c_pad)


def _pack3x3(w, ci_pad, co_pad):
    """torch (O, I, 3, 3) -> (9*I_pad, O_pad) bf16, tap-major rows (tap = kh*3 + kw),
    zero rows/cols for padded channels."""
    o, i = w.shape[0], w.shape[1]
    wt = jnp.transpose(w, (2, 3, 1, 0))                       # (3, 3, I, O)
    wt = jnp.pad(wt, ((0, 0), (0, 0), (0, ci_pad - i), (0, co_pad - o)))
    return wt.reshape(9 * ci_pad, co_pad).astype(jnp.bfloat16)


def _choose_batch_tile(B, HW):
    """Pack batch samples per grid step for small images, but keep >=2 parallel grid steps
    whenever B >= 2 (megacore / v7x dual-TC)."""
    bt = 1
    for cand in range(1, B + 1):
        if B % cand:
            continue
        if cand * HW > 4096:
            break
        if B >= 2 and cand > 1 and B // cand < 2:
            continue
        bt = cand
    return bt


# ------------------------------ host wrapper ----------------------------------

def vae_residual_block(x_nchw, params, groups=32, eps=1e-5):
    B, Cin, H, W = x_nchw.shape
    Cout = params["w1"].shape[0]
    assert Cin % groups == 0 and Cout % groups == 0, \
        "GroupNorm requires groups to divide both in_channels and out_channels"
    use_res_conv = (Cin != Cout)
    numpy_roll, roll_bf16 = _probe_roll()
    single_buf = _buffered_one_supported()

    HW = H * W
    Bt = _choose_batch_tile(B, HW)
    Cinp = _round_up(Cin, _LANE)
    Coutp = _round_up(Cout, _LANE)
    N = Bt * HW

    x_nhwc = jnp.transpose(x_nchw, (0, 2, 3, 1)).astype(jnp.float32)
    x_nhwc = jnp.pad(x_nhwc, ((0, 0), (0, 0), (0, 0), (0, Cinp - Cin)))

    args = [
        x_nhwc,
        _tap_masks_host(Bt, H, W),
        _avg_matrix_host(Cin, Cinp, groups, HW),
        _avg_matrix_host(Cout, Coutp, groups, HW),
        _pad_vec(params["g1"], Cinp), _pad_vec(params["b1"], Cinp),
        _pack3x3(params["w1"], Cinp, Coutp), _pad_vec(params["cb1"], Coutp),
        _pad_vec(params["g2"], Coutp), _pad_vec(params["b2"], Coutp),
        _pack3x3(params["w2"], Coutp, Coutp), _pad_vec(params["cb2"], Coutp),
    ]

    def const_spec(shape):
        n = len(shape)
        if single_buf:
            return pl.BlockSpec(shape, lambda b, _n=n: (0,) * _n,
                                pipeline_mode=pl.Buffered(1))
        return pl.BlockSpec(shape, lambda b, _n=n: (0,) * _n)

    in_specs = [
        pl.BlockSpec((Bt, H, W, Cinp), lambda b: (b, 0, 0, 0)),
        const_spec((N, 9)),
        const_spec((Cinp, Cinp)), const_spec((Coutp, Coutp)),
        const_spec((1, Cinp)), const_spec((1, Cinp)),
        const_spec((9 * Cinp, Coutp)), const_spec((1, Coutp)),
        const_spec((1, Coutp)), const_spec((1, Coutp)),
        const_spec((9 * Coutp, Coutp)), const_spec((1, Coutp)),
    ]

    if use_res_conv:
        wres = jnp.transpose(params["wres"][:, :, 0, 0], (1, 0))     # (I, O)
        wres = jnp.pad(wres, ((0, Cinp - Cin), (0, Coutp - Cout))).astype(jnp.bfloat16)
        args += [wres, _pad_vec(params["bres"], Coutp)]
        in_specs += [const_spec((Cinp, Coutp)), const_spec((1, Coutp))]

    kernel = _make_kernel(Bt, H, W, Cinp, Coutp, eps, use_res_conv, numpy_roll, roll_bf16)

    # ---- VMEM budget per grid step (with headroom) --------------------------------------
    wbuf = 1 if single_buf else 2
    const_bytes = wbuf * (
        2 * (9 * Cinp * Coutp + 9 * Coutp * Coutp + (Cinp * Coutp if use_res_conv else 0))
        + 4 * (Cinp * Cinp + Coutp * Coutp) + 2 * N * 9
        + 4 * 2 * (Cinp + 4 * Coutp))
    io_bytes = 2 * 4 * N * (Cinp + Coutp)                    # double-buffered x / out blocks
    tmp_bytes = N * max(Cinp, Coutp) * (4 * 4 + 2 * 2)       # live f32/bf16 intermediates
    vmem_limit = int(min(64 * 1024 * 1024,
                         max(32 * 1024 * 1024, 2 * (const_bytes + io_bytes + tmp_bytes))))

    # ---- advisory cost estimate ----------------------------------------------------------
    res_flops = 2 * B * HW * Cinp * Coutp if use_res_conv else 0
    flops = 2 * B * HW * 9 * (Cinp * Coutp + Coutp * Coutp) + res_flops \
        + 14 * B * HW * (Cinp + Coutp)
    transcendentals = 3 * B * HW * (Cinp + Coutp)
    bytes_accessed = 4 * B * HW * (Cinp + Coutp) + const_bytes // wbuf

    out = pl.pallas_call(
        kernel,
        out_shape=jax.ShapeDtypeStruct((B, H, W, Coutp), jnp.float32),
        grid=(B // Bt,),
        in_specs=in_specs,
        out_specs=pl.BlockSpec((Bt, H, W, Coutp), lambda b: (b, 0, 0, 0)),
        compiler_params=pltpu.CompilerParams(
            dimension_semantics=("parallel",),
            vmem_limit_bytes=vmem_limit),
        cost_estimate=pl.CostEstimate(flops=int(flops),
                                      transcendentals=int(transcendentals),
                                      bytes_accessed=int(bytes_accessed)),
    )(*args)

    out = out[..., :Cout]                         # strip channel padding
    return jnp.transpose(out, (0, 3, 1, 2))       # back to NCHW


# --------------------------- params & reference -------------------------------

def init_params(key, Cin, Cout):
    ks = jax.random.split(key, 10)

    def conv_w(k, o, i, kh, kw):
        fan_in = i * kh * kw
        return jax.random.normal(k, (o, i, kh, kw), jnp.float32) / jnp.sqrt(fan_in)

    p = dict(
        g1=1.0 + 0.1 * jax.random.normal(ks[0], (Cin,), jnp.float32),
        b1=0.1 * jax.random.normal(ks[1], (Cin,), jnp.float32),
        w1=conv_w(ks[2], Cout, Cin, 3, 3),
        cb1=0.1 * jax.random.normal(ks[3], (Cout,), jnp.float32),
        g2=1.0 + 0.1 * jax.random.normal(ks[4], (Cout,), jnp.float32),
        b2=0.1 * jax.random.normal(ks[5], (Cout,), jnp.float32),
        w2=conv_w(ks[6], Cout, Cout, 3, 3),
        cb2=0.1 * jax.random.normal(ks[7], (Cout,), jnp.float32),
    )
    if Cin != Cout:
        p["wres"] = conv_w(ks[8], Cout, Cin, 1, 1)
        p["bres"] = 0.1 * jax.random.normal(ks[9], (Cout,), jnp.float32)
    return p


def reference(x, p, groups=32, eps=1e-5):
    def gn(x, gamma, beta):
        B, C, H, W = x.shape
        xg = x.reshape(B, groups, -1)
        mean = xg.mean(-1, keepdims=True)
        var = xg.var(-1, keepdims=True)
        xn = ((xg - mean) * jax.lax.rsqrt(var + eps)).reshape(B, C, H, W)
        return xn * gamma[None, :, None, None] + beta[None, :, None, None]

    def conv(x, w, b, pad):
        y = jax.lax.conv_general_dilated(
            x, w, (1, 1), [(pad, pad), (pad, pad)],
            dimension_numbers=("NCHW", "OIHW", "NCHW"))
        return y + b[None, :, None, None]

    h = jax.nn.silu(gn(x, p["g1"], p["b1"]))
    h = conv(h, p["w1"], p["cb1"], 1)
    h = jax.nn.silu(gn(h, p["g2"], p["b2"]))
    h = conv(h, p["w2"], p["cb2"], 1)
    res = conv(x, p["wres"], p["bres"], 0) if "wres" in p else x
    return h + res


# ----------------------------------- main --------------------------------------

if __name__ == "__main__":
    key = jax.random.PRNGKey(0)
    kx, kp, kp2, kx3, kp3 = jax.random.split(key, 5)

    def check(x, p, tag):
        out = jax.block_until_ready(vae_residual_block(x, p))
        ref = reference(x, p)
        assert out.shape == ref.shape, f"shape mismatch ({tag}): {out.shape} vs {ref.shape}"
        max_err = float(jnp.max(jnp.abs(out - ref)))
        mean_err = float(jnp.mean(jnp.abs(out - ref)))
        # Conv matmuls run in bf16 (f32 accumulation), so tolerances are bf16-level.
        assert max_err < 2e-1 and mean_err < 2e-2, \
            f"mismatch ({tag}): max={max_err} mean={mean_err}"

    # GroupNorm(32, C) requires C % 32 == 0, so smallest sensible channels are 64/128.
    B, Cin, Cout, H, W = 2, 64, 128, 16, 16
    x = jax.random.normal(kx, (B, Cin, H, W), jnp.float32)

    # Case 1: in_channels != out_channels -> 1x1-conv residual path (channels padded 64->128)
    check(x, init_params(kp, Cin, Cout), "res-conv")

    # Case 2: in_channels == out_channels -> identity residual path
    check(x, init_params(kp2, Cin, Cin), "identity")

    # Case 3: small spatial, B=4 -> two samples packed per grid step (per-sample GroupNorm,
    # masks must also block cross-sample conv bleed)
    x3 = jax.random.normal(kx3, (4, 64, 8, 8), jnp.float32)
    check(x3, init_params(kp3, 64, 128), "batch-packed")

    print("KERNEL_OK")
</pallas_src>

<mosaic_0001>
module attributes {stable_mosaic.version = 11 : i64} {
  func.func @probe(%arg0: memref<8x128xf32, #tpu.memory_space<vmem>>, %arg1: memref<8x128xf32, #tpu.memory_space<vmem>>) attributes {dimension_semantics = [], scalar_prefetch = 0 : i64, scratch_operands = 0 : i64, tpu.core_type = #tpu.core_type<tc>} {
    %c0 = arith.constant 0 : index
    %c0_0 = arith.constant 0 : index
    %0 = vector.load %arg0[%c0, %c0_0] : memref<8x128xf32, #tpu.memory_space<vmem>>, vector<8x128xf32>
    %c1_i32 = arith.constant 1 : i32
    %1 = tpu.dynamic_rotate %0 by %c1_i32 dim 0 : vector<8x128xf32>, i32 -> vector<8x128xf32>
    %c0_1 = arith.constant 0 : index
    %c0_2 = arith.constant 0 : index
    %2 = vector.load %arg1[%c0_1, %c0_2] : memref<8x128xf32, #tpu.memory_space<vmem>>, vector<8x128xf32>
    tpu.vector_store %arg1[%c0_1, %c0_2], %1 {strides = array<i32>} : memref<8x128xf32, #tpu.memory_space<vmem>>, vector<8x128xf32>,
    return
  }
}

</mosaic_0001>

<llo_original>
// kernel: tpu_custom_call.1
$region0: #{tpu_custom_call.1}
  #allocation0 [shape = 'u32[]', space=smem, size = 0x4, offset = 0x4, fixed_abs, tag = 'smem constant byte address 0x4 - core index']
  #allocation1 [shape = 'u32[144,128]{1,0:T(1,128)}', space=vmem, size = 0x12000, scoped, tag = 'internal scratch']
  %s0 = inlined_call_operand.hbm [shape: f32[8,128], index: 0, kind: input, shape index: {}]
  %s1 = inlined_call_operand.hbm [shape: f32[8,128], index: 1, kind: output, shape index: {}]
  %s2 = sld [smem:[#allocation0]]
  $region18: #{tpu_custom_call.1} parent=0
    _
  %s4 = ssub.s32 1, %s2
  %s5 = scalar_select 0, %s4, %s2
  $region1: #{tpu_custom_call.1} parent=0
    #allocation2 [shape = 'u8[4096]{0}', space=vmem, size = 0x1000, scoped, tag = 'input window, operand 0, single buffered']
    #allocation3 [shape = 's32[1]{0}', space=sflag, size = 0x4, scoped, tag = 'scoped memory for tpu_custom_call.1']
    #allocation4 [shape = 's32[1]{0}', space=sflag, size = 0x4, scoped, tag = 'scoped memory for tpu_custom_call.1']
    #allocation5 [shape = 'u8[4096]{0}', space=vmem, size = 0x1000, scoped, tag = 'output window, operand 0, single buffered']
    %6 = vsyncpa [#allocation3], 0
    %7 = vsyncpa [#allocation4], 0
    // Predicated region
    $region2: #{tpu_custom_call.1} parent=1 // pred_check
      _
    $region3: #{tpu_custom_call.1} parent=1 // pred_check_branch
      %9 = sbr.rel (0) target = $region5
    $region4: #{tpu_custom_call.1} parent=1 // pred_region
      %s11 = ssub.s32 128, 128
      %12 = vsyncadd [#allocation3], %s11
      %s14 = sshll.u32 [#allocation2], 4
      %s15 = int_to_ptr.vmem [resolvable:$true] %s14
      %17 = dma.hbm_to_vmem [thread:$0]  %s0, 128, %s15, [#allocation3]
    $region5: #{tpu_custom_call.1} parent=1 // pred_fallthru
      _
    // Predicated region
    $region6: #{tpu_custom_call.1} parent=1 // pred_check
      _
    $region7: #{tpu_custom_call.1} parent=1 // pred_check_branch
      %19 = sbr.rel (0) target = $region9
    $region8: #{tpu_custom_call.1} parent=1 // pred_region
      %20 = dma.done [#allocation3], 128
    $region9: #{tpu_custom_call.1} parent=1 // pred_fallthru
      _
    %v21 = vld [vmem:[#allocation2] sm:$0xff]
    %v22 = vrot.slane %v21, 7
    %23 = vst [vmem:[#allocation5] sm:$0xff] %v22
    // Predicated region
    $region10: #{tpu_custom_call.1} parent=1 // pred_check
      _
    $region11: #{tpu_custom_call.1} parent=1 // pred_check_branch
      %25 = sbr.rel (0) target = $region13
    $region12: #{tpu_custom_call.1} parent=1 // pred_region
      %s27 = ssub.s32 128, 128
      %28 = vsyncadd [#allocation4], %s27
      %s30 = sshll.u32 [#allocation5], 4
      %s31 = int_to_ptr.vmem [resolvable:$true] %s30
      %33 = dma.vmem_to_hbm [thread:$0]  %s31, 128, %s1, [#allocation4]
    $region13: #{tpu_custom_call.1} parent=1 // pred_fallthru
      _
    // Predicated region
    $region14: #{tpu_custom_call.1} parent=1 // pred_check
      _
    $region15: #{tpu_custom_call.1} parent=1 // pred_check_branch
      %35 = sbr.rel (0) target = $region17
    $region16: #{tpu_custom_call.1} parent=1 // pred_region
      %36 = dma.done [#allocation4], 128
    $region17: #{tpu_custom_call.1} parent=1 // pred_fallthru
      _
    %37 = vsyncpa [#allocation3], 1
    %38 = vsyncpa [#allocation4], 1

</llo_original>
